<compile_context>
chip_gen: v6e
topology: v6e:2x2x1
jax: 0.10.0
libtpu: 0.0.40
codegen_flags: <defaults>
</compile_context>

<pallas_src>
import functools

import jax
import jax.numpy as jnp
from jax.experimental import pallas as pl
from jax.experimental.pallas import tpu as pltpu


# ------------------------------ helpers ------------------------------------

def _round_up(x, m):
    return (x + m - 1) // m * m


def _pick_k_tile(d, cap=512):
    """Largest multiple of 128 that divides d (d is a multiple of 128), <= cap."""
    t = min(d, cap)
    t -= t % 128
    t = max(t, 128)
    while d % t:
        t -= 128
    return t


# ----------------------------- Pallas kernel -------------------------------

def _triplet_mlp_kernel(ax_ref, px_ref, nx_ref,      # f32 (tm, tk) input tiles
                        w1_ref, b1_ref, w2_ref, b2_ref,
                        oa_ref, op_ref, on_ref,      # f32 (tm, E_pad) outputs
                        acc_ref):                    # f32 (3*tm, H_pad) scratch
    """Fused shared-weight MLP: out = relu(x @ w1 + b1) @ w2 + b2 for a/p/n."""
    k = pl.program_id(1)
    tm = ax_ref.shape[0]

    # Stack a/p/n into one MXU operand (tiles are already resident in VMEM),
    # cast to bf16 only at the MXU boundary; accumulate in f32.
    x_all = jnp.concatenate(
        [ax_ref[...], px_ref[...], nx_ref[...]], axis=0).astype(jnp.bfloat16)
    partial = jnp.dot(x_all, w1_ref[...], preferred_element_type=jnp.float32)

    # Fold accumulator init into the first K step (no separate zero-store).
    @pl.when(k == 0)
    def _init():
        acc_ref[...] = partial

    @pl.when(k > 0)
    def _accum():
        acc_ref[...] += partial

    @pl.when(k == pl.num_programs(1) - 1)
    def _finalize():
        b1 = b1_ref[...]                              # f32 (1, H_pad)
        b2 = b2_ref[...]                              # f32 (1, E_pad)
        h = jnp.maximum(acc_ref[...] + b1, 0.0)       # f32 bias + ReLU (VPU)
        h = h.astype(jnp.bfloat16)                    # bf16 only for the MXU
        o = jnp.dot(h, w2_ref[...],
                    preferred_element_type=jnp.float32) + b2
        oa_ref[...] = o[0:tm].astype(oa_ref.dtype)
        op_ref[...] = o[tm:2 * tm].astype(op_ref.dtype)
        on_ref[...] = o[2 * tm:3 * tm].astype(on_ref.dtype)


# ------------------------------ wrapper -------------------------------------

@functools.partial(jax.jit, static_argnames=("d_emb",))
def _triplet_forward(a, p, n, w1p, b1p, w2p, b2p, *, d_emb):
    d_in_pad, d_hid_pad = w1p.shape
    d_emb_pad = w2p.shape[1]
    B = a.shape[0]

    # Row padding / tiling.  Inputs stay f32 (8-row sublane granularity); aim
    # for >=2 row tiles so both v7x TensorCores get work, 128-row tiles once
    # the batch is large.
    b_pad = _round_up(B, 8)
    if b_pad >= 256:
        tm = 128
        b_pad = _round_up(B, tm)
    elif b_pad >= 16 and b_pad % 16 == 0:
        tm = b_pad // 2
    else:
        tm = b_pad

    # Keep w1 fully resident (K axis of extent 1) unless it is genuinely big.
    w1_bytes = d_in_pad * d_hid_pad * 2                # bf16 weights
    if w1_bytes <= 16 * 1024 * 1024:
        tk = d_in_pad
    else:
        tk = _pick_k_tile(d_in_pad, cap=512)
    grid = (b_pad // tm, d_in_pad // tk)

    def prep(x):
        # reshape is layout-free for contiguous NCHW; inputs stay f32 so the
        # kernel reads them straight from HBM (no cast/copy pre-pass).
        xf = x.reshape(B, -1)
        pad_r, pad_c = b_pad - B, d_in_pad - xf.shape[1]
        if pad_r or pad_c:
            xf = jnp.pad(xf, ((0, pad_r), (0, pad_c)))
        return xf

    af, pf, nf = prep(a), prep(p), prep(n)

    x_spec = pl.BlockSpec((tm, tk), lambda i, k: (i, k))
    w1_spec = pl.BlockSpec((tk, d_hid_pad), lambda i, k: (k, 0))
    b1_spec = pl.BlockSpec((1, d_hid_pad), lambda i, k: (0, 0))
    w2_spec = pl.BlockSpec((d_hid_pad, d_emb_pad), lambda i, k: (0, 0))
    b2_spec = pl.BlockSpec((1, d_emb_pad), lambda i, k: (0, 0))
    o_spec = pl.BlockSpec((tm, d_emb_pad), lambda i, k: (i, 0))

    out_sd = jax.ShapeDtypeStruct((b_pad, d_emb_pad), jnp.float32)

    ea, ep, en = pl.pallas_call(
        _triplet_mlp_kernel,
        out_shape=(out_sd, out_sd, out_sd),
        grid_spec=pltpu.PrefetchScalarGridSpec(
            num_scalar_prefetch=0,
            grid=grid,
            in_specs=[x_spec, x_spec, x_spec,
                      w1_spec, b1_spec, w2_spec, b2_spec],
            out_specs=(o_spec, o_spec, o_spec),
            scratch_shapes=[
                pltpu.VMEM((3 * tm, d_hid_pad), jnp.float32),
            ],
        ),
        compiler_params=pltpu.CompilerParams(
            dimension_semantics=("parallel", "arbitrary"),
            vmem_limit_bytes=48 * 1024 * 1024,
        ),
    )(af, pf, nf, w1p, b1p, w2p, b2p)

    # Slice the real rows / embedding columns back out (padding discarded).
    return ea[:B, :d_emb], ep[:B, :d_emb], en[:B, :d_emb]


# ------------------------------ TripletNet ----------------------------------

class TripletNet:
    """Triplet Network: shared embeddingnet applied to (a, p, n)."""
    # TODO(synk): PyTorch takes an arbitrary `embeddingnet` module; here the
    # shared embedding net is a concrete 2-layer MLP fused into the kernel.

    def __init__(self, params):
        w1, b1, w2, b2 = params
        d_in, d_hid = w1.shape
        d_emb = w2.shape[1]
        self.d_emb = d_emb

        # Pad weights to lane-dense (multiple-of-128) shapes ONCE; matmul
        # operands pre-cast to bf16, biases stay f32 for the VPU.
        d_in_pad = _round_up(max(d_in, 128), 128)
        d_hid_pad = _round_up(max(d_hid, 128), 128)
        d_emb_pad = _round_up(max(d_emb, 128), 128)

        self.w1p = jnp.pad(
            w1, ((0, d_in_pad - d_in), (0, d_hid_pad - d_hid))).astype(jnp.bfloat16)
        self.b1p = jnp.pad(
            b1.reshape(1, -1), ((0, 0), (0, d_hid_pad - d_hid))).astype(jnp.float32)
        self.w2p = jnp.pad(
            w2, ((0, d_hid_pad - d_hid), (0, d_emb_pad - d_emb))).astype(jnp.bfloat16)
        self.b2p = jnp.pad(
            b2.reshape(1, -1), ((0, 0), (0, d_emb_pad - d_emb))).astype(jnp.float32)

    def __call__(self, a, p, n):
        return _triplet_forward(a, p, n, self.w1p, self.b1p, self.w2p, self.b2p,
                                d_emb=self.d_emb)


def init_params(key, d_in, d_hid, d_emb):
    k1, k2 = jax.random.split(key)
    w1 = (jax.random.normal(k1, (d_in, d_hid), jnp.float32)
          / jnp.sqrt(jnp.float32(d_in)))
    b1 = jnp.zeros((1, d_hid), jnp.float32)
    w2 = (jax.random.normal(k2, (d_hid, d_emb), jnp.float32)
          / jnp.sqrt(jnp.float32(d_hid)))
    b2 = jnp.zeros((1, d_emb), jnp.float32)
    return (w1, b1, w2, b2)


# --------------------------------- main --------------------------------------

if __name__ == "__main__":
    key = jax.random.PRNGKey(0)
    ka, kp, kn, kw = jax.random.split(key, 4)

    B, C, H, W = 2, 4, 16, 16          # NCHW, small shapes
    D_IN = C * H * W                   # 1024
    D_HID = 128
    D_EMB = 32

    a = jax.random.normal(ka, (B, C, H, W), jnp.float32)
    p = jax.random.normal(kp, (B, C, H, W), jnp.float32)
    n = jax.random.normal(kn, (B, C, H, W), jnp.float32)

    params = init_params(kw, D_IN, D_HID, D_EMB)
    net = TripletNet(params)

    ea, ep, en = net(a, p, n)
    jax.block_until_ready((ea, ep, en))

    # Reference (plain JAX) mimicking bf16 MXU operands with f32 accumulation.
    def ref_embed(x, w1, b1, w2, b2):
        xf = x.reshape(x.shape[0], -1)
        xb = xf.astype(jnp.bfloat16).astype(jnp.float32)
        w1b = w1.astype(jnp.bfloat16).astype(jnp.float32)
        h = jnp.maximum(xb @ w1b + b1, 0.0)
        hb = h.astype(jnp.bfloat16).astype(jnp.float32)
        w2b = w2.astype(jnp.bfloat16).astype(jnp.float32)
        return hb @ w2b + b2

    w1, b1, w2, b2 = params
    ra = ref_embed(a, w1, b1, w2, b2)
    rp = ref_embed(p, w1, b1, w2, b2)
    rn = ref_embed(n, w1, b1, w2, b2)

    assert ea.shape == (B, D_EMB) and ep.shape == (B, D_EMB) and en.shape == (B, D_EMB)
    assert jnp.allclose(ea, ra, atol=1e-2, rtol=1e-2)
    assert jnp.allclose(ep, rp, atol=1e-2, rtol=1e-2)
    assert jnp.allclose(en, rn, atol=1e-2, rtol=1e-2)

    print("KERNEL_OK")
</pallas_src>

<mosaic_0001>
module attributes {stable_mosaic.version = 11 : i64} {
  func.func @_triplet_mlp_kernel(%arg0: i32, %arg1: i32, %arg2: memref<8x1024xf32, #tpu.memory_space<vmem>>, %arg3: memref<8x1024xf32, #tpu.memory_space<vmem>>, %arg4: memref<8x1024xf32, #tpu.memory_space<vmem>>, %arg5: memref<1024x128xbf16, #tpu.memory_space<vmem>>, %arg6: memref<1x128xf32, #tpu.memory_space<vmem>>, %arg7: memref<128x128xbf16, #tpu.memory_space<vmem>>, %arg8: memref<1x128xf32, #tpu.memory_space<vmem>>, %arg9: memref<8x128xf32, #tpu.memory_space<vmem>>, %arg10: memref<8x128xf32, #tpu.memory_space<vmem>>, %arg11: memref<8x128xf32, #tpu.memory_space<vmem>>, %arg12: memref<24x128xf32, #tpu.memory_space<vmem>>) attributes {dimension_semantics = [#tpu.dimension_semantics<parallel>, #tpu.dimension_semantics<arbitrary>], iteration_bounds = array<i64: 1, 1>, scalar_prefetch = 0 : i64, scratch_operands = 1 : i64, tpu.core_type = #tpu.core_type<tc>, window_params = [{transform_indices = @transform_0, window_bounds = array<i64: 8, 1024>}, {transform_indices = @transform_1, window_bounds = array<i64: 8, 1024>}, {transform_indices = @transform_2, window_bounds = array<i64: 8, 1024>}, {transform_indices = @transform_3, window_bounds = array<i64: 1024, 128>}, {pipeline_mode = #tpu.pipeline_mode<synchronous>, transform_indices = @transform_4, window_bounds = array<i64: 1, 128>}, {pipeline_mode = #tpu.pipeline_mode<synchronous>, transform_indices = @transform_5, window_bounds = array<i64: 128, 128>}, {pipeline_mode = #tpu.pipeline_mode<synchronous>, transform_indices = @transform_6, window_bounds = array<i64: 1, 128>}, {transform_indices = @transform_7, window_bounds = array<i64: 8, 128>}, {transform_indices = @transform_8, window_bounds = array<i64: 8, 128>}, {transform_indices = @transform_9, window_bounds = array<i64: 8, 128>}]} {
    %c0 = arith.constant 0 : index
    %c0_0 = arith.constant 0 : index
    %0 = vector.load %arg2[%c0, %c0_0] : memref<8x1024xf32, #tpu.memory_space<vmem>>, vector<8x1024xf32>
    %c0_1 = arith.constant 0 : index
    %c0_2 = arith.constant 0 : index
    %1 = vector.load %arg3[%c0_1, %c0_2] : memref<8x1024xf32, #tpu.memory_space<vmem>>, vector<8x1024xf32>
    %c0_3 = arith.constant 0 : index
    %c0_4 = arith.constant 0 : index
    %2 = vector.load %arg4[%c0_3, %c0_4] : memref<8x1024xf32, #tpu.memory_space<vmem>>, vector<8x1024xf32>
    %3 = tpu.concatenate %0, %1, %2 in 0 : vector<8x1024xf32>, vector<8x1024xf32>, vector<8x1024xf32> -> vector<24x1024xf32>
    %4 = arith.truncf %3 : vector<24x1024xf32> to vector<24x1024xbf16>
    %c0_5 = arith.constant 0 : index
    %c0_6 = arith.constant 0 : index
    %5 = vector.load %arg5[%c0_5, %c0_6] : memref<1024x128xbf16, #tpu.memory_space<vmem>>, vector<1024x128xbf16>
    %cst = arith.constant dense<0.000000e+00> : vector<24x128xf32>
    %6 = tpu.matmul %4, %5, %cst {dimension_numbers = #tpu.dot_dimension_numbers<[1], [0], [0], [1], [0, 0, 1, 1], [], []>} : vector<24x1024xbf16>, vector<1024x128xbf16>, vector<24x128xf32> -> vector<24x128xf32>
    %c0_i32 = arith.constant 0 : i32
    %7 = arith.cmpi eq, %arg1, %c0_i32 : i32
    %8 = arith.extui %7 : i1 to i32
    %c0_i32_7 = arith.constant 0 : i32
    %9 = arith.cmpi ne, %8, %c0_i32_7 : i32
    scf.if %9 {
      %c0_12 = arith.constant 0 : index
      %c0_13 = arith.constant 0 : index
      %16 = vector.load %arg12[%c0_12, %c0_13] : memref<24x128xf32, #tpu.memory_space<vmem>>, vector<24x128xf32>
      tpu.vector_store %arg12[%c0_12, %c0_13], %6 {strides = array<i32>} : memref<24x128xf32, #tpu.memory_space<vmem>>, vector<24x128xf32>,
    } else {
    }
    %c0_i32_8 = arith.constant 0 : i32
    %10 = arith.cmpi sgt, %arg1, %c0_i32_8 : i32
    %11 = arith.extui %10 : i1 to i32
    %c0_i32_9 = arith.constant 0 : i32
    %12 = arith.cmpi ne, %11, %c0_i32_9 : i32
    scf.if %12 {
      %c0_12 = arith.constant 0 : index
      %c0_13 = arith.constant 0 : index
      %16 = vector.load %arg12[%c0_12, %c0_13] : memref<24x128xf32, #tpu.memory_space<vmem>>, vector<24x128xf32>
      %17 = arith.addf %16, %6 : vector<24x128xf32>
      %c0_14 = arith.constant 0 : index
      %c0_15 = arith.constant 0 : index
      %18 = vector.load %arg12[%c0_14, %c0_15] : memref<24x128xf32, #tpu.memory_space<vmem>>, vector<24x128xf32>
      tpu.vector_store %arg12[%c0_14, %c0_15], %17 {strides = array<i32>} : memref<24x128xf32, #tpu.memory_space<vmem>>, vector<24x128xf32>,
    } else {
    }
    %c0_i32_10 = arith.constant 0 : i32
    %13 = arith.cmpi eq, %arg1, %c0_i32_10 : i32
    %14 = arith.extui %13 : i1 to i32
    %c0_i32_11 = arith.constant 0 : i32
    %15 = arith.cmpi ne, %14, %c0_i32_11 : i32
    scf.if %15 {
      %c0_12 = arith.constant 0 : index
      %c0_13 = arith.constant 0 : index
      %16 = vector.load %arg6[%c0_12, %c0_13] : memref<1x128xf32, #tpu.memory_space<vmem>>, vector<1x128xf32>
      %c0_14 = arith.constant 0 : index
      %c0_15 = arith.constant 0 : index
      %17 = vector.load %arg8[%c0_14, %c0_15] : memref<1x128xf32, #tpu.memory_space<vmem>>, vector<1x128xf32>
      %c0_16 = arith.constant 0 : index
      %c0_17 = arith.constant 0 : index
      %18 = vector.load %arg12[%c0_16, %c0_17] : memref<24x128xf32, #tpu.memory_space<vmem>>, vector<24x128xf32>
      %19 = vector.broadcast %16 : vector<1x128xf32> to vector<24x128xf32>
      %20 = arith.addf %18, %19 : vector<24x128xf32>
      %cst_18 = arith.constant 0.000000e+00 : f32
      %21 = vector.broadcast %cst_18 : f32 to vector<24x128xf32>
      %22 = arith.maximumf %20, %21 : vector<24x128xf32>
      %23 = arith.truncf %22 : vector<24x128xf32> to vector<24x128xbf16>
      %c0_19 = arith.constant 0 : index
      %c0_20 = arith.constant 0 : index
      %24 = vector.load %arg7[%c0_19, %c0_20] : memref<128x128xbf16, #tpu.memory_space<vmem>>, vector<128x128xbf16>
      %cst_21 = arith.constant dense<0.000000e+00> : vector<24x128xf32>
      %25 = tpu.matmul %23, %24, %cst_21 {dimension_numbers = #tpu.dot_dimension_numbers<[1], [0], [0], [1], [0, 0, 1, 1], [], []>} : vector<24x128xbf16>, vector<128x128xbf16>, vector<24x128xf32> -> vector<24x128xf32>
      %26 = vector.broadcast %17 : vector<1x128xf32> to vector<24x128xf32>
      %27 = arith.addf %25, %26 : vector<24x128xf32>
      %28 = vector.extract_strided_slice %27 {offsets = [0, 0], sizes = [8, 128], strides = [1, 1]} : vector<24x128xf32> to vector<8x128xf32>
      %c0_22 = arith.constant 0 : index
      %c0_23 = arith.constant 0 : index
      %29 = vector.load %arg9[%c0_22, %c0_23] : memref<8x128xf32, #tpu.memory_space<vmem>>, vector<8x128xf32>
      tpu.vector_store %arg9[%c0_22, %c0_23], %28 {strides = array<i32>} : memref<8x128xf32, #tpu.memory_space<vmem>>, vector<8x128xf32>,
      %30 = vector.extract_strided_slice %27 {offsets = [8, 0], sizes = [8, 128], strides = [1, 1]} : vector<24x128xf32> to vector<8x128xf32>
      %c0_24 = arith.constant 0 : index
      %c0_25 = arith.constant 0 : index
      %31 = vector.load %arg10[%c0_24, %c0_25] : memref<8x128xf32, #tpu.memory_space<vmem>>, vector<8x128xf32>
      tpu.vector_store %arg10[%c0_24, %c0_25], %30 {strides = array<i32>} : memref<8x128xf32, #tpu.memory_space<vmem>>, vector<8x128xf32>,
      %32 = vector.extract_strided_slice %27 {offsets = [16, 0], sizes = [8, 128], strides = [1, 1]} : vector<24x128xf32> to vector<8x128xf32>
      %c0_26 = arith.constant 0 : index
      %c0_27 = arith.constant 0 : index
      %33 = vector.load %arg11[%c0_26, %c0_27] : memref<8x128xf32, #tpu.memory_space<vmem>>, vector<8x128xf32>
      tpu.vector_store %arg11[%c0_26, %c0_27], %32 {strides = array<i32>} : memref<8x128xf32, #tpu.memory_space<vmem>>, vector<8x128xf32>,
    } else {
    }
    return
  }
  func.func @transform_0(%arg0: i32, %arg1: i32) -> (i32, i32) {
    %c0_i32 = arith.constant 0 : i32
    return %arg0, %arg1 : i32, i32
  }
  func.func @transform_1(%arg0: i32, %arg1: i32) -> (i32, i32) {
    %c0_i32 = arith.constant 0 : i32
    return %arg0, %arg1 : i32, i32
  }
  func.func @transform_2(%arg0: i32, %arg1: i32) -> (i32, i32) {
    %c0_i32 = arith.constant 0 : i32
    return %arg0, %arg1 : i32, i32
  }
  func.func @transform_3(%arg0: i32, %arg1: i32) -> (i32, i32) {
    %c0_i32 = arith.constant 0 : i32
    %c0_i32_0 = arith.constant 0 : i32
    return %arg1, %c0_i32 : i32, i32
  }
  func.func @transform_4(%arg0: i32, %arg1: i32) -> (i32, i32) {
    %c0_i32 = arith.constant 0 : i32
    %c0_i32_0 = arith.constant 0 : i32
    %c0_i32_1 = arith.constant 0 : i32
    return %c0_i32, %c0_i32_0 : i32, i32
  }
  func.func @transform_5(%arg0: i32, %arg1: i32) -> (i32, i32) {
    %c0_i32 = arith.constant 0 : i32
    %c0_i32_0 = arith.constant 0 : i32
    %c0_i32_1 = arith.constant 0 : i32
    return %c0_i32, %c0_i32_0 : i32, i32
  }
  func.func @transform_6(%arg0: i32, %arg1: i32) -> (i32, i32) {
    %c0_i32 = arith.constant 0 : i32
    %c0_i32_0 = arith.constant 0 : i32
    %c0_i32_1 = arith.constant 0 : i32
    return %c0_i32, %c0_i32_0 : i32, i32
  }
  func.func @transform_7(%arg0: i32, %arg1: i32) -> (i32, i32) {
    %c0_i32 = arith.constant 0 : i32
    %c0_i32_0 = arith.constant 0 : i32
    return %arg0, %c0_i32 : i32, i32
  }
  func.func @transform_8(%arg0: i32, %arg1: i32) -> (i32, i32) {
    %c0_i32 = arith.constant 0 : i32
    %c0_i32_0 = arith.constant 0 : i32
    return %arg0, %c0_i32 : i32, i32
  }
  func.func @transform_9(%arg0: i32, %arg1: i32) -> (i32, i32) {
    %c0_i32 = arith.constant 0 : i32
    %c0_i32_0 = arith.constant 0 : i32
    return %arg0, %c0_i32 : i32, i32
  }
}

</mosaic_0001>

<llo_original>
// kernel: _triplet_forward.1
$region0: #{_triplet_forward.1}
  #allocation0 [shape = 'u32[]', space=smem, size = 0x4, offset = 0x4, fixed_abs, tag = 'smem constant byte address 0x4 - core index']
  #allocation1 [shape = 'u32[144,128]{1,0:T(1,128)}', space=vmem, size = 0x12000, scoped, tag = 'internal scratch']
  #allocation2 [shape = 'f32[24,128]{1,0:T(8,128)}', space=vmem, size = 0x3000, scoped, tag = 'scratch operand']
  %s0 = inlined_call_operand.vmem [shape: f32[8,1024], index: 0, kind: input, shape index: {}]
  %s1 = inlined_call_operand.vmem [shape: f32[8,1024], index: 1, kind: input, shape index: {}]
  %s2 = inlined_call_operand.vmem [shape: f32[8,1024], index: 2, kind: input, shape index: {}]
  %s3 = inlined_call_operand.vmem [shape: bf16[1024,128], index: 3, kind: input, shape index: {}]
  %s4 = inlined_call_operand.vmem [shape: f32[1,128], index: 4, kind: input, shape index: {}]
  %s5 = inlined_call_operand.vmem [shape: bf16[128,128], index: 5, kind: input, shape index: {}]
  %s6 = inlined_call_operand.vmem [shape: f32[1,128], index: 6, kind: input, shape index: {}]
  %s7 = inlined_call_operand.vmem [shape: f32[8,128], index: 7, kind: output, shape index: {0}]
  %s8 = inlined_call_operand.vmem [shape: f32[8,128], index: 8, kind: output, shape index: {1}]
  %s9 = inlined_call_operand.vmem [shape: f32[8,128], index: 9, kind: output, shape index: {2}]
  %10 = xla_tuple %s7, %s8, %s9
  %s11 = sld [smem:[#allocation0]]
  $region66: #{_triplet_forward.1} parent=0
    _
  %s13 = ssub.s32 1, %s11
  %s14 = scalar_select 0, %s13, %s11
  // Predicated region
  $region2: #{_triplet_forward.1} parent=0 // pred_check
    _
  $region3: #{_triplet_forward.1} parent=0 // pred_check_branch
    %16 = sbr.rel (0) target = $region5
  $region4: #{_triplet_forward.1} parent=0 // pred_region
    _
  $region5: #{_triplet_forward.1} parent=0 // pred_fallthru
    _
  // Predicated region
  $region6: #{_triplet_forward.1} parent=0 // pred_check
    _
  $region7: #{_triplet_forward.1} parent=0 // pred_check_branch
    %18 = sbr.rel (0) target = $region9
  $region8: #{_triplet_forward.1} parent=0 // pred_region
    _
  $region9: #{_triplet_forward.1} parent=0 // pred_fallthru
    _
  // Predicated region
  $region10: #{_triplet_forward.1} parent=0 // pred_check
    _
  $region11: #{_triplet_forward.1} parent=0 // pred_check_branch
    %20 = sbr.rel (0) target = $region13
  $region12: #{_triplet_forward.1} parent=0 // pred_region
    _
  $region13: #{_triplet_forward.1} parent=0 // pred_fallthru
    _
  // Predicated region
  $region14: #{_triplet_forward.1} parent=0 // pred_check
    _
  $region15: #{_triplet_forward.1} parent=0 // pred_check_branch
    %22 = sbr.rel (0) target = $region17
  $region16: #{_triplet_forward.1} parent=0 // pred_region
    _
  $region17: #{_triplet_forward.1} parent=0 // pred_fallthru
    _
  // Predicated region
  $region18: #{_triplet_forward.1} parent=0 // pred_check
    _
  $region19: #{_triplet_forward.1} parent=0 // pred_check_branch
    %24 = sbr.rel (0) target = $region21
  $region20: #{_triplet_forward.1} parent=0 // pred_region
    _
  $region21: #{_triplet_forward.1} parent=0 // pred_fallthru
    _
  // Predicated region
  $region22: #{_triplet_forward.1} parent=0 // pred_check
    _
  $region23: #{_triplet_forward.1} parent=0 // pred_check_branch
    %26 = sbr.rel (0) target = $region25
  $region24: #{_triplet_forward.1} parent=0 // pred_region
    _
  $region25: #{_triplet_forward.1} parent=0 // pred_fallthru
    _
  // Predicated region
  $region26: #{_triplet_forward.1} parent=0 // pred_check
    _
  $region27: #{_triplet_forward.1} parent=0 // pred_check_branch
    %28 = sbr.rel (0) target = $region29
  $region28: #{_triplet_forward.1} parent=0 // pred_region
    _
  $region29: #{_triplet_forward.1} parent=0 // pred_fallthru
    _
  %v30 = vld [vmem:[%s0] sm:$0xff]
  %v31 = vld [vmem:[%s0 + $0x8] sm:$0xff]
  %v32 = vld [vmem:[%s0 + $0x10] sm:$0xff]
  %v33 = vld [vmem:[%s0 + $0x18] sm:$0xff]
  %v34 = vld [vmem:[%s0 + $0x20] sm:$0xff]
  %v35 = vld [vmem:[%s0 + $0x28] sm:$0xff]
  %v36 = vld [vmem:[%s0 + $0x30] sm:$0xff]
  %v37 = vld [vmem:[%s0 + $0x38] sm:$0xff]
  %v38 = vld [vmem:[%s1] sm:$0xff]
  %v39 = vld [vmem:[%s1 + $0x8] sm:$0xff]
  %v40 = vld [vmem:[%s1 + $0x10] sm:$0xff]
  %v41 = vld [vmem:[%s1 + $0x18] sm:$0xff]
  %v42 = vld [vmem:[%s1 + $0x20] sm:$0xff]
  %v43 = vld [vmem:[%s1 + $0x28] sm:$0xff]
  %v44 = vld [vmem:[%s1 + $0x30] sm:$0xff]
  %v45 = vld [vmem:[%s1 + $0x38] sm:$0xff]
  %v46 = vld [vmem:[%s2] sm:$0xff]
  %v47 = vld [vmem:[%s2 + $0x8] sm:$0xff]
  %v48 = vld [vmem:[%s2 + $0x10] sm:$0xff]
  %v49 = vld [vmem:[%s2 + $0x18] sm:$0xff]
  %v50 = vld [vmem:[%s2 + $0x20] sm:$0xff]
  %v51 = vld [vmem:[%s2 + $0x28] sm:$0xff]
  %v52 = vld [vmem:[%s2 + $0x30] sm:$0xff]
  %v53 = vld [vmem:[%s2 + $0x38] sm:$0xff]
  %v54 = vpack.c.bf16 %v38, %v30
  %v55 = vpack.c.bf16 %v39, %v31
  %v56 = vpack.c.bf16 %v40, %v32
  %v57 = vpack.c.bf16 %v41, %v33
  %v58 = vpack.c.bf16 %v42, %v34
  %v59 = vpack.c.bf16 %v43, %v35
  %v60 = vpack.c.bf16 %v44, %v36
  %v61 = vpack.c.bf16 %v45, %v37
  %v62 = vpack.c.bf16 %v46, %v46
  %v63 = vpack.c.bf16 %v47, %v47
  %v64 = vpack.c.bf16 %v48, %v48
  %v65 = vpack.c.bf16 %v49, %v49
  %v66 = vpack.c.bf16 %v50, %v50
  %v67 = vpack.c.bf16 %v51, %v51
  %v68 = vpack.c.bf16 %v52, %v52
  %v69 = vpack.c.bf16 %v53, %v53
  %v70 = vld [vmem:[%s3] sm:$0xf]
  %v71 = vld [vmem:[%s3 + $0x4] sm:$0xf]
  %v72 = vld [vmem:[%s3 + $0x8] sm:$0xf]
  %v73 = vld [vmem:[%s3 + $0xc] sm:$0xf]
  %v74 = vld [vmem:[%s3 + $0x10] sm:$0xf]
  %v75 = vld [vmem:[%s3 + $0x14] sm:$0xf]
  %v76 = vld [vmem:[%s3 + $0x18] sm:$0xf]
  %v77 = vld [vmem:[%s3 + $0x1c] sm:$0xf]
  %v78 = vld [vmem:[%s3 + $0x20] sm:$0xf]
  %v79 = vld [vmem:[%s3 + $0x24] sm:$0xf]
  %v80 = vld [vmem:[%s3 + $0x28] sm:$0xf]
  %v81 = vld [vmem:[%s3 + $0x2c] sm:$0xf]
  %v82 = vld [vmem:[%s3 + $0x30] sm:$0xf]
  %v83 = vld [vmem:[%s3 + $0x34] sm:$0xf]
  %v84 = vld [vmem:[%s3 + $0x38] sm:$0xf]
  %v85 = vld [vmem:[%s3 + $0x3c] sm:$0xf]
  %v86 = vld [vmem:[%s3 + $0x40] sm:$0xf]
  %v87 = vld [vmem:[%s3 + $0x44] sm:$0xf]
  %v88 = vld [vmem:[%s3 + $0x48] sm:$0xf]
  %v89 = vld [vmem:[%s3 + $0x4c] sm:$0xf]
  %v90 = vld [vmem:[%s3 + $0x50] sm:$0xf]
  %v91 = vld [vmem:[%s3 + $0x54] sm:$0xf]
  %v92 = vld [vmem:[%s3 + $0x58] sm:$0xf]
  %v93 = vld [vmem:[%s3 + $0x5c] sm:$0xf]
  %v94 = vld [vmem:[%s3 + $0x60] sm:$0xf]
  %v95 = vld [vmem:[%s3 + $0x64] sm:$0xf]
  %v96 = vld [vmem:[%s3 + $0x68] sm:$0xf]
  %v97 = vld [vmem:[%s3 + $0x6c] sm:$0xf]
  %v98 = vld [vmem:[%s3 + $0x70] sm:$0xf]
  %v99 = vld [vmem:[%s3 + $0x74] sm:$0xf]
  %v100 = vld [vmem:[%s3 + $0x78] sm:$0xf]
  %v101 = vld [vmem:[%s3 + $0x7c] sm:$0xf]
  %v102 = vld [vmem:[%s3 + $0x80] sm:$0xf]
  %v103 = vld [vmem:[%s3 + $0x84] sm:$0xf]
  %v104 = vld [vmem:[%s3 + $0x88] sm:$0xf]
  %v105 = vld [vmem:[%s3 + $0x8c] sm:$0xf]
  %v106 = vld [vmem:[%s3 + $0x90] sm:$0xf]
  %v107 = vld [vmem:[%s3 + $0x94] sm:$0xf]
  %v108 = vld [vmem:[%s3 + $0x98] sm:$0xf]
  %v109 = vld [vmem:[%s3 + $0x9c] sm:$0xf]
  %v110 = vld [vmem:[%s3 + $0xa0] sm:$0xf]
  %v111 = vld [vmem:[%s3 + $0xa4] sm:$0xf]
  %v112 = vld [vmem:[%s3 + $0xa8] sm:$0xf]
  %v113 = vld [vmem:[%s3 + $0xac] sm:$0xf]
  %v114 = vld [vmem:[%s3 + $0xb0] sm:$0xf]
  %v115 = vld [vmem:[%s3 + $0xb4] sm:$0xf]
  %v116 = vld [vmem:[%s3 + $0xb8] sm:$0xf]
  %v117 = vld [vmem:[%s3 + $0xbc] sm:$0xf]
  %v118 = vld [vmem:[%s3 + $0xc0] sm:$0xf]
  %v119 = vld [vmem:[%s3 + $0xc4] sm:$0xf]
  %v120 = vld [vmem:[%s3 + $0xc8] sm:$0xf]
  %v121 = vld [vmem:[%s3 + $0xcc] sm:$0xf]
  %v122 = vld [vmem:[%s3 + $0xd0] sm:$0xf]
  %v123 = vld [vmem:[%s3 + $0xd4] sm:$0xf]
  %v124 = vld [vmem:[%s3 + $0xd8] sm:$0xf]
  %v125 = vld [vmem:[%s3 + $0xdc] sm:$0xf]
  %v126 = vld [vmem:[%s3 + $0xe0] sm:$0xf]
  %v127 = vld [vmem:[%s3 + $0xe4] sm:$0xf]
  %v128 = vld [vmem:[%s3 + $0xe8] sm:$0xf]
  %v129 = vld [vmem:[%s3 + $0xec] sm:$0xf]
  %v130 = vld [vmem:[%s3 + $0xf0] sm:$0xf]
  %v131 = vld [vmem:[%s3 + $0xf4] sm:$0xf]
  %v132 = vld [vmem:[%s3 + $0xf8] sm:$0xf]
  %v133 = vld [vmem:[%s3 + $0xfc] sm:$0xf]
  %v134 = vld [vmem:[%s3 + $0x100] sm:$0xf]
  %v135 = vld [vmem:[%s3 + $0x104] sm:$0xf]
  %v136 = vld [vmem:[%s3 + $0x108] sm:$0xf]
  %v137 = vld [vmem:[%s3 + $0x10c] sm:$0xf]
  %v138 = vld [vmem:[%s3 + $0x110] sm:$0xf]
  %v139 = vld [vmem:[%s3 + $0x114] sm:$0xf]
  %v140 = vld [vmem:[%s3 + $0x118] sm:$0xf]
  %v141 = vld [vmem:[%s3 + $0x11c] sm:$0xf]
  %v142 = vld [vmem:[%s3 + $0x120] sm:$0xf]
  %v143 = vld [vmem:[%s3 + $0x124] sm:$0xf]
  %v144 = vld [vmem:[%s3 + $0x128] sm:$0xf]
  %v145 = vld [vmem:[%s3 + $0x12c] sm:$0xf]
  %v146 = vld [vmem:[%s3 + $0x130] sm:$0xf]
  %v147 = vld [vmem:[%s3 + $0x134] sm:$0xf]
  %v148 = vld [vmem:[%s3 + $0x138] sm:$0xf]
  %v149 = vld [vmem:[%s3 + $0x13c] sm:$0xf]
  %v150 = vld [vmem:[%s3 + $0x140] sm:$0xf]
  %v151 = vld [vmem:[%s3 + $0x144] sm:$0xf]
  %v152 = vld [vmem:[%s3 + $0x148] sm:$0xf]
  %v153 = vld [vmem:[%s3 + $0x14c] sm:$0xf]
  %v154 = vld [vmem:[%s3 + $0x150] sm:$0xf]
  %v155 = vld [vmem:[%s3 + $0x154] sm:$0xf]
  %v156 = vld [vmem:[%s3 + $0x158] sm:$0xf]
  %v157 = vld [vmem:[%s3 + $0x15c] sm:$0xf]
  %v158 = vld [vmem:[%s3 + $0x160] sm:$0xf]
  %v159 = vld [vmem:[%s3 + $0x164] sm:$0xf]
  %v160 = vld [vmem:[%s3 + $0x168] sm:$0xf]
  %v161 = vld [vmem:[%s3 + $0x16c] sm:$0xf]
  %v162 = vld [vmem:[%s3 + $0x170] sm:$0xf]
  %v163 = vld [vmem:[%s3 + $0x174] sm:$0xf]
  %v164 = vld [vmem:[%s3 + $0x178] sm:$0xf]
  %v165 = vld [vmem:[%s3 + $0x17c] sm:$0xf]
  %v166 = vld [vmem:[%s3 + $0x180] sm:$0xf]
  %v167 = vld [vmem:[%s3 + $0x184] sm:$0xf]
  %v168 = vld [vmem:[%s3 + $0x188] sm:$0xf]
  %v169 = vld [vmem:[%s3 + $0x18c] sm:$0xf]
  %v170 = vld [vmem:[%s3 + $0x190] sm:$0xf]
  %v171 = vld [vmem:[%s3 + $0x194] sm:$0xf]
  %v172 = vld [vmem:[%s3 + $0x198] sm:$0xf]
  %v173 = vld [vmem:[%s3 + $0x19c] sm:$0xf]
  %v174 = vld [vmem:[%s3 + $0x1a0] sm:$0xf]
  %v175 = vld [vmem:[%s3 + $0x1a4] sm:$0xf]
  %v176 = vld [vmem:[%s3 + $0x1a8] sm:$0xf]
  %v177 = vld [vmem:[%s3 + $0x1ac] sm:$0xf]
  %v178 = vld [vmem:[%s3 + $0x1b0] sm:$0xf]
  %v179 = vld [vmem:[%s3 + $0x1b4] sm:$0xf]
  %v180 = vld [vmem:[%s3 + $0x1b8] sm:$0xf]
  %v181 = vld [vmem:[%s3 + $0x1bc] sm:$0xf]
  %v182 = vld [vmem:[%s3 + $0x1c0] sm:$0xf]
  %v183 = vld [vmem:[%s3 + $0x1c4] sm:$0xf]
  %v184 = vld [vmem:[%s3 + $0x1c8] sm:$0xf]
  %v185 = vld [vmem:[%s3 + $0x1cc] sm:$0xf]
  %v186 = vld [vmem:[%s3 + $0x1d0] sm:$0xf]
  %v187 = vld [vmem:[%s3 + $0x1d4] sm:$0xf]
  %v188 = vld [vmem:[%s3 + $0x1d8] sm:$0xf]
  %v189 = vld [vmem:[%s3 + $0x1dc] sm:$0xf]
  %v190 = vld [vmem:[%s3 + $0x1e0] sm:$0xf]
  %v191 = vld [vmem:[%s3 + $0x1e4] sm:$0xf]
  %v192 = vld [vmem:[%s3 + $0x1e8] sm:$0xf]
  %v193 = vld [vmem:[%s3 + $0x1ec] sm:$0xf]
  %v194 = vld [vmem:[%s3 + $0x1f0] sm:$0xf]
  %v195 = vld [vmem:[%s3 + $0x1f4] sm:$0xf]
  %v196 = vld [vmem:[%s3 + $0x1f8] sm:$0xf]
  %v197 = vld [vmem:[%s3 + $0x1fc] sm:$0xf]
  %v326 = vunpack.c.l.b16 %v70
  %v327 = vunpack.c.l.b16 %v71
  %v328 = vunpack.c.l.b16 %v72
  %v329 = vunpack.c.l.b16 %v73
  %v330 = vunpack.c.l.b16 %v74
  %v331 = vunpack.c.l.b16 %v75
  %v332 = vunpack.c.l.b16 %v76
  %v333 = vunpack.c.l.b16 %v77
  %v334 = vunpack.c.l.b16 %v78
  %v335 = vunpack.c.l.b16 %v79
  %v336 = vunpack.c.l.b16 %v80
  %v337 = vunpack.c.l.b16 %v81
  %v338 = vunpack.c.l.b16 %v82
  %v339 = vunpack.c.l.b16 %v83
  %v340 = vunpack.c.l.b16 %v84
  %v341 = vunpack.c.l.b16 %v85
  %v342 = vunpack.c.l.b16 %v86
  %v343 = vunpack.c.l.b16 %v87
  %v344 = vunpack.c.l.b16 %v88
  %v345 = vunpack.c.l.b16 %v89
  %v346 = vunpack.c.l.b16 %v90
  %v347 = vunpack.c.l.b16 %v91
  %v348 = vunpack.c.l.b16 %v92
  %v349 = vunpack.c.l.b16 %v93
  %v350 = vunpack.c.l.b16 %v94
  %v351 = vunpack.c.l.b16 %v95
  %v352 = vunpack.c.l.b16 %v96
  %v353 = vunpack.c.l.b16 %v97
  %v354 = vunpack.c.l.b16 %v98
  %v355 = vunpack.c.l.b16 %v99
  %v356 = vunpack.c.l.b16 %v100
  %v357 = vunpack.c.l.b16 %v101
  %v358 = vunpack.c.l.b16 %v102
  %v359 = vunpack.c.l.b16 %v103
  %v360 = vunpack.c.l.b16 %v104
  %v361 = vunpack.c.l.b16 %v105
  %v362 = vunpack.c.l.b16 %v106
  %v363 = vunpack.c.l.b16 %v107
  %v364 = vunpack.c.l.b16 %v108
  %v365 = vunpack.c.l.b16 %v109
  %v366 = vunpack.c.l.b16 %v110
  %v367 = vunpack.c.l.b16 %v111
  %v368 = vunpack.c.l.b16 %v112
  %v369 = vunpack.c.l.b16 %v113
  %v370 = vunpack.c.l.b16 %v114
  %v371 = vunpack.c.l.b16 %v115
  %v372 = vunpack.c.l.b16 %v116
  %v373 = vunpack.c.l.b16 %v117
  %v374 = vunpack.c.l.b16 %v118
  %v375 = vunpack.c.l.b16 %v119
  %v376 = vunpack.c.l.b16 %v120
  %v377 = vunpack.c.l.b16 %v121
  %v378 = vunpack.c.l.b16 %v122
  %v379 = vunpack.c.l.b16 %v123
  %v380 = vunpack.c.l.b16 %v124
  %v381 = vunpack.c.l.b16 %v125
  %v382 = vunpack.c.l.b16 %v126
  %v383 = vunpack.c.l.b16 %v127
  %v384 = vunpack.c.l.b16 %v128
  %v385 = vunpack.c.l.b16 %v129
  %v386 = vunpack.c.l.b16 %v130
  %v387 = vunpack.c.l.b16 %v131
  %v388 = vunpack.c.l.b16 %v132
  %v389 = vunpack.c.l.b16 %v133
  %v390 = vunpack.c.l.b16 %v134
  %v391 = vunpack.c.l.b16 %v135
  %v392 = vunpack.c.l.b16 %v136
  %v393 = vunpack.c.l.b16 %v137
  %v394 = vunpack.c.l.b16 %v138
  %v395 = vunpack.c.l.b16 %v139
  %v396 = vunpack.c.l.b16 %v140
  %v397 = vunpack.c.l.b16 %v141
  %v398 = vunpack.c.l.b16 %v142
  %v399 = vunpack.c.l.b16 %v143
  %v400 = vunpack.c.l.b16 %v144
  %v401 = vunpack.c.l.b16 %v145
  %v402 = vunpack.c.l.b16 %v146
  %v403 = vunpack.c.l.b16 %v147
  %v404 = vunpack.c.l.b16 %v148
  %v405 = vunpack.c.l.b16 %v149
  %v406 = vunpack.c.l.b16 %v150
  %v407 = vunpack.c.l.b16 %v151
  %v408 = vunpack.c.l.b16 %v152
  %v409 = vunpack.c.l.b16 %v153
  %v410 = vunpack.c.l.b16 %v154
  %v411 = vunpack.c.l.b16 %v155
  %v412 = vunpack.c.l.b16 %v156
  %v413 = vunpack.c.l.b16 %v157
  %v414 = vunpack.c.l.b16 %v158
  %v415 = vunpack.c.l.b16 %v159
  %v416 = vunpack.c.l.b16 %v160
  %v417 = vunpack.c.l.b16 %v161
  %v418 = vunpack.c.l.b16 %v162
  %v419 = vunpack.c.l.b16 %v163
  %v420 = vunpack.c.l.b16 %v164
  %v421 = vunpack.c.l.b16 %v165
  %v422 = vunpack.c.l.b16 %v166
  %v423 = vunpack.c.l.b16 %v167
  %v424 = vunpack.c.l.b16 %v168
  %v425 = vunpack.c.l.b16 %v169
  %v426 = vunpack.c.l.b16 %v170
  %v427 = vunpack.c.l.b16 %v171
  %v428 = vunpack.c.l.b16 %v172
  %v429 = vunpack.c.l.b16 %v173
  %v430 = vunpack.c.l.b16 %v174
  %v431 = vunpack.c.l.b16 %v175
  %v432 = vunpack.c.l.b16 %v176
  %v433 = vunpack.c.l.b16 %v177
  %v434 = vunpack.c.l.b16 %v178
  %v435 = vunpack.c.l.b16 %v179
  %v436 = vunpack.c.l.b16 %v180
  %v437 = vunpack.c.l.b16 %v181
  %v438 = vunpack.c.l.b16 %v182
  %v439 = vunpack.c.l.b16 %v183
  %v440 = vunpack.c.l.b16 %v184
  %v441 = vunpack.c.l.b16 %v185
  %v442 = vunpack.c.l.b16 %v186
  %v443 = vunpack.c.l.b16 %v187
  %v444 = vunpack.c.l.b16 %v188
  %v445 = vunpack.c.l.b16 %v189
  %v446 = vunpack.c.l.b16 %v190
  %v447 = vunpack.c.l.b16 %v191
  %v448 = vunpack.c.l.b16 %v192
  %v449 = vunpack.c.l.b16 %v193
  %v450 = vunpack.c.l.b16 %v194
  %v451 = vunpack.c.l.b16 %v195
  %v452 = vunpack.c.l.b16 %v196
  %v453 = vunpack.c.l.b16 %v197
  %v454 = vpack.c.b16 %v327, %v326
  %v455 = vpack.c.b16 %v329, %v328
  %v456 = vpack.c.b16 %v331, %v330
  %v457 = vpack.c.b16 %v333, %v332
  %v458 = vpack.c.b16 %v335, %v334
  %v459 = vpack.c.b16 %v337, %v336
  %v460 = vpack.c.b16 %v339, %v338
  %v461 = vpack.c.b16 %v341, %v340
  %v462 = vpack.c.b16 %v343, %v342
  %v463 = vpack.c.b16 %v345, %v344
  %v464 = vpack.c.b16 %v347, %v346
  %v465 = vpack.c.b16 %v349, %v348
  %v466 = vpack.c.b16 %v351, %v350
  %v467 = vpack.c.b16 %v353, %v352
  %v468 = vpack.c.b16 %v355, %v354
  %v469 = vpack.c.b16 %v357, %v356
  %v470 = vpack.c.b16 %v359, %v358
  %v471 = vpack.c.b16 %v361, %v360
  %v472 = vpack.c.b16 %v363, %v362
  %v473 = vpack.c.b16 %v365, %v364
  %v474 = vpack.c.b16 %v367, %v366
  %v475 = vpack.c.b16 %v369, %v368
  %v476 = vpack.c.b16 %v371, %v370
  %v477 = vpack.c.b16 %v373, %v372
  %v478 = vpack.c.b16 %v375, %v374
  %v479 = vpack.c.b16 %v377, %v376
  %v480 = vpack.c.b16 %v379, %v378
  %v481 = vpack.c.b16 %v381, %v380
  %v482 = vpack.c.b16 %v383, %v382
  %v483 = vpack.c.b16 %v385, %v384
  %v484 = vpack.c.b16 %v387, %v386
  %v485 = vpack.c.b16 %v389, %v388
  %v486 = vpack.c.b16 %v391, %v390
  %v487 = vpack.c.b16 %v393, %v392
  %v488 = vpack.c.b16 %v395, %v394
  %v489 = vpack.c.b16 %v397, %v396
  %v490 = vpack.c.b16 %v399, %v398
  %v491 = vpack.c.b16 %v401, %v400
  %v492 = vpack.c.b16 %v403, %v402
  %v493 = vpack.c.b16 %v405, %v404
  %v494 = vpack.c.b16 %v407, %v406
  %v495 = vpack.c.b16 %v409, %v408
  %v496 = vpack.c.b16 %v411, %v410
  %v497 = vpack.c.b16 %v413, %v412
  %v498 = vpack.c.b16 %v415, %v414
  %v499 = vpack.c.b16 %v417, %v416
  %v500 = vpack.c.b16 %v419, %v418
  %v501 = vpack.c.b16 %v421, %v420
  %v502 = vpack.c.b16 %v423, %v422
  %v503 = vpack.c.b16 %v425, %v424
  %v504 = vpack.c.b16 %v427, %v426
  %v505 = vpack.c.b16 %v429, %v428
  %v506 = vpack.c.b16 %v431, %v430
  %v507 = vpack.c.b16 %v433, %v432
  %v508 = vpack.c.b16 %v435, %v434
  %v509 = vpack.c.b16 %v437, %v436
  %v510 = vpack.c.b16 %v439, %v438
  %v511 = vpack.c.b16 %v441, %v440
  %v512 = vpack.c.b16 %v443, %v442
  %v513 = vpack.c.b16 %v445, %v444
  %v514 = vpack.c.b16 %v447, %v446
  %v515 = vpack.c.b16 %v449, %v448
  %v516 = vpack.c.b16 %v451, %v450
  %v517 = vpack.c.b16 %v453, %v452
  %582 = vmatprep.subr.bf16.mxu0 0
  %583 = vmatpush1.bf16.msra.mxu0 %v461
  %584 = vmatprep.subr.bf16.mxu0 0
  %585 = vmatpush1.bf16.msra.mxu0 %v460
  %586 = vmatprep.subr.bf16.mxu0 0
  %587 = vmatpush1.bf16.msra.mxu0 %v459
  %588 = vmatprep.subr.bf16.mxu0 0
  %589 = vmatpush1.bf16.msra.mxu0 %v458
  %590 = vmatprep.subr.bf16.mxu0 0
  %591 = vmatpush1.bf16.msra.mxu0 %v457
  %592 = vmatprep.subr.bf16.mxu0 0
  %593 = vmatpush1.bf16.msra.mxu0 %v456
  %594 = vmatprep.subr.bf16.mxu0 0
  %595 = vmatpush1.bf16.msra.mxu0 %v455
  %596 = vmatprep.subr.bf16.mxu0 0
  %597 = vmatpush1.bf16.msra.mxu0 %v454
  %598 = vmatprep.subr.bf16.mxu0 0
  %599 = vmatpush2.bf16.msra.mxu0 %v469
  %600 = vmatprep.subr.bf16.mxu0 0
  %601 = vmatpush2.bf16.msra.mxu0 %v468
  %602 = vmatprep.subr.bf16.mxu0 0
  %603 = vmatpush2.bf16.msra.mxu0 %v467
  %604 = vmatprep.subr.bf16.mxu0 0
  %605 = vmatpush2.bf16.msra.mxu0 %v466
  %606 = vmatprep.subr.bf16.mxu0 0
  %607 = vmatpush2.bf16.msra.mxu0 %v465
  %608 = vmatprep.subr.bf16.mxu0 0
  %609 = vmatpush2.bf16.msra.mxu0 %v464
  %610 = vmatprep.subr.bf16.mxu0 0
  %611 = vmatpush2.bf16.msra.mxu0 %v463
  %612 = vmatprep.subr.bf16.mxu0 0
  %613 = vmatpush2.bf16.msra.mxu0 %v462
  %614 = vmatprep.mubr.bf16.mxu0 %v55
  %615 = vmatmul.mubr.bf16.gmra.mxu0 %v54
  %v616 = vpop.f32.mrf.mxu0
  %v617 = vadd.f32 0.0, %v616
  %v618 = vpop.f32.mrf.mxu0
  %v619 = vpop.f32.mrf.mxu0
  %v620 = vadd.f32 0.0, %v619
  %v621 = vpop.f32.mrf.mxu0
  %622 = vmatprep.mubr.bf16.mxu0 %v63
  %623 = vmatmul.mubr.bf16.gmra.mxu0 %v62
  %v624 = vpop.f32.mrf.mxu0
  %v625 = vadd.f32 0.0, %v624
  %v626 = vpop.f32.mrf.mxu0
  %v627 = vpop.f32.mrf.mxu0
  %v628 = vpop.f32.mrf.mxu0
  %629 = vdwg.mxu0
  %630 = vmatprep.subr.bf16.mxu0 0
  %631 = vmatpush1.bf16.msra.mxu0 %v477
  %632 = vmatprep.subr.bf16.mxu0 0
  %633 = vmatpush1.bf16.msra.mxu0 %v476
  %634 = vmatprep.subr.bf16.mxu0 0
  %635 = vmatpush1.bf16.msra.mxu0 %v475
  %636 = vmatprep.subr.bf16.mxu0 0
  %637 = vmatpush1.bf16.msra.mxu0 %v474
  %638 = vmatprep.subr.bf16.mxu0 0
  %639 = vmatpush1.bf16.msra.mxu0 %v473
  %640 = vmatprep.subr.bf16.mxu0 0
  %641 = vmatpush1.bf16.msra.mxu0 %v472
  %642 = vmatprep.subr.bf16.mxu0 0
  %643 = vmatpush1.bf16.msra.mxu0 %v471
  %644 = vmatprep.subr.bf16.mxu0 0
  %645 = vmatpush1.bf16.msra.mxu0 %v470
  %646 = vmatprep.subr.bf16.mxu0 0
  %647 = vmatpush2.bf16.msra.mxu0 %v485
  %648 = vmatprep.subr.bf16.mxu0 0
  %649 = vmatpush2.bf16.msra.mxu0 %v484
  %650 = vmatprep.subr.bf16.mxu0 0
  %651 = vmatpush2.bf16.msra.mxu0 %v483
  %652 = vmatprep.subr.bf16.mxu0 0
  %653 = vmatpush2.bf16.msra.mxu0 %v482
  %654 = vmatprep.subr.bf16.mxu0 0
  %655 = vmatpush2.bf16.msra.mxu0 %v481
  %656 = vmatprep.subr.bf16.mxu0 0
  %657 = vmatpush2.bf16.msra.mxu0 %v480
  %658 = vmatprep.subr.bf16.mxu0 0
  %659 = vmatpush2.bf16.msra.mxu0 %v479
  %660 = vmatprep.subr.bf16.mxu0 0
  %661 = vmatpush2.bf16.msra.mxu0 %v478
  %662 = vmatprep.mubr.bf16.mxu0 %v57
  %663 = vmatmul.mubr.bf16.gmra.mxu0 %v56
  %v664 = vpop.f32.mrf.mxu0
  %v665 = vadd.f32 %v617, %v664
  %v666 = vpop.f32.mrf.mxu0
  %v667 = vpop.f32.mrf.mxu0
  %v668 = vadd.f32 %v620, %v667
  %v669 = vpop.f32.mrf.mxu0
  %670 = vmatprep.mubr.bf16.mxu0 %v65
  %671 = vmatmul.mubr.bf16.gmra.mxu0 %v64
  %v672 = vpop.f32.mrf.mxu0
  %v673 = vadd.f32 %v625, %v672
  %v674 = vpop.f32.mrf.mxu0
  %v675 = vpop.f32.mrf.mxu0
  %v676 = vpop.f32.mrf.mxu0
  %677 = vdwg.mxu0
  %678 = vmatprep.subr.bf16.mxu0 0
  %679 = vmatpush1.bf16.msra.mxu0 %v493
  %680 = vmatprep.subr.bf16.mxu0 0
  %681 = vmatpush1.bf16.msra.mxu0 %v492
  %682 = vmatprep.subr.bf16.mxu0 0
  %683 = vmatpush1.bf16.msra.mxu0 %v491
  %684 = vmatprep.subr.bf16.mxu0 0
  %685 = vmatpush1.bf16.msra.mxu0 %v490
  %686 = vmatprep.subr.bf16.mxu0 0
  %687 = vmatpush1.bf16.msra.mxu0 %v489
  %688 = vmatprep.subr.bf16.mxu0 0
  %689 = vmatpush1.bf16.msra.mxu0 %v488
  %690 = vmatprep.subr.bf16.mxu0 0
  %691 = vmatpush1.bf16.msra.mxu0 %v487
  %692 = vmatprep.subr.bf16.mxu0 0
  %693 = vmatpush1.bf16.msra.mxu0 %v486
  %694 = vmatprep.subr.bf16.mxu0 0
  %695 = vmatpush2.bf16.msra.mxu0 %v501
  %696 = vmatprep.subr.bf16.mxu0 0
  %697 = vmatpush2.bf16.msra.mxu0 %v500
  %698 = vmatprep.subr.bf16.mxu0 0
  %699 = vmatpush2.bf16.msra.mxu0 %v499
  %700 = vmatprep.subr.bf16.mxu0 0
  %701 = vmatpush2.bf16.msra.mxu0 %v498
  %702 = vmatprep.subr.bf16.mxu0 0
  %703 = vmatpush2.bf16.msra.mxu0 %v497
  %704 = vmatprep.subr.bf16.mxu0 0
  %705 = vmatpush2.bf16.msra.mxu0 %v496
  %706 = vmatprep.subr.bf16.mxu0 0
  %707 = vmatpush2.bf16.msra.mxu0 %v495
  %708 = vmatprep.subr.bf16.mxu0 0
  %709 = vmatpush2.bf16.msra.mxu0 %v494
  %710 = vmatprep.mubr.bf16.mxu0 %v59
  %711 = vmatmul.mubr.bf16.gmra.mxu0 %v58
  %v712 = vpop.f32.mrf.mxu0
  %v713 = vadd.f32 %v665, %v712
  %v714 = vpop.f32.mrf.mxu0
  %v715 = vpop.f32.mrf.mxu0
  %v716 = vadd.f32 %v668, %v715
  %v717 = vpop.f32.mrf.mxu0
  %718 = vmatprep.mubr.bf16.mxu0 %v67
  %719 = vmatmul.mubr.bf16.gmra.mxu0 %v66
  %v720 = vpop.f32.mrf.mxu0
  %v721 = vadd.f32 %v673, %v720
  %v722 = vpop.f32.mrf.mxu0
  %v723 = vpop.f32.mrf.mxu0
  %v724 = vpop.f32.mrf.mxu0
  %725 = vdwg.mxu0
  %726 = vmatprep.subr.bf16.mxu0 0
  %727 = vmatpush1.bf16.msra.mxu0 %v509
  %728 = vmatprep.subr.bf16.mxu0 0
  %729 = vmatpush1.bf16.msra.mxu0 %v508
  %730 = vmatprep.subr.bf16.mxu0 0
  %731 = vmatpush1.bf16.msra.mxu0 %v507
  %732 = vmatprep.subr.bf16.mxu0 0
  %733 = vmatpush1.bf16.msra.mxu0 %v506
  %734 = vmatprep.subr.bf16.mxu0 0
  %735 = vmatpush1.bf16.msra.mxu0 %v505
  %736 = vmatprep.subr.bf16.mxu0 0
  %737 = vmatpush1.bf16.msra.mxu0 %v504
  %738 = vmatprep.subr.bf16.mxu0 0
  %739 = vmatpush1.bf16.msra.mxu0 %v503
  %740 = vmatprep.subr.bf16.mxu0 0
  %741 = vmatpush1.bf16.msra.mxu0 %v502
  %742 = vmatprep.subr.bf16.mxu0 0
  %743 = vmatpush2.bf16.msra.mxu0 %v517
  %744 = vmatprep.subr.bf16.mxu0 0
  %745 = vmatpush2.bf16.msra.mxu0 %v516
  %746 = vmatprep.subr.bf16.mxu0 0
  %747 = vmatpush2.bf16.msra.mxu0 %v515
  %748 = vmatprep.subr.bf16.mxu0 0
  %749 = vmatpush2.bf16.msra.mxu0 %v514
  %750 = vmatprep.subr.bf16.mxu0 0
  %751 = vmatpush2.bf16.msra.mxu0 %v513
  %752 = vmatprep.subr.bf16.mxu0 0
  %753 = vmatpush2.bf16.msra.mxu0 %v512
  %754 = vmatprep.subr.bf16.mxu0 0
  %755 = vmatpush2.bf16.msra.mxu0 %v511
  %756 = vmatprep.subr.bf16.mxu0 0
  %757 = vmatpush2.bf16.msra.mxu0 %v510
  %758 = vmatprep.mubr.bf16.mxu0 %v61
  %759 = vmatmul.mubr.bf16.gmra.mxu0 %v60
  %v760 = vpop.f32.mrf.mxu0
  %v761 = vadd.f32 %v713, %v760
  %v762 = vpop.f32.mrf.mxu0
  %v763 = vpop.f32.mrf.mxu0
  %v764 = vadd.f32 %v716, %v763
  %v765 = vpop.f32.mrf.mxu0
  %766 = vmatprep.mubr.bf16.mxu0 %v69
  %767 = vmatmul.mubr.bf16.gmra.mxu0 %v68
  %v768 = vpop.f32.mrf.mxu0
  %v769 = vadd.f32 %v721, %v768
  %v770 = vpop.f32.mrf.mxu0
  %v771 = vpop.f32.mrf.mxu0
  %v772 = vpop.f32.mrf.mxu0
  %773 = vdwg.mxu0
  %p774 = scmp.eq.s32.totalorder 0, 0
  // Predicated region
  $region30: #{_triplet_forward.1} parent=0 // pred_check
    %p775 = pneg %p774
  $region31: #{_triplet_forward.1} parent=0 // pred_check_branch
    %777 = sbr.rel (%p775) target = $region33
  $region32: #{_triplet_forward.1} parent=0 // pred_region
    %778 = vst [vmem:[#allocation2] sm:$0xff] %v761
    %779 = vst [vmem:[#allocation2 + $0x8] sm:$0xff] %v764
    %780 = vst [vmem:[#allocation2 + $0x10] sm:$0xff] %v769
  $region33: #{_triplet_forward.1} parent=0 // pred_fallthru
    _
  %p781 = scmp.gt.s32.totalorder 0, 0
  // Predicated region
  $region34: #{_triplet_forward.1} parent=0 // pred_check
    %p782 = pneg %p781
  $region35: #{_triplet_forward.1} parent=0 // pred_check_branch
    %784 = sbr.rel (%p782) target = $region37
  $region36: #{_triplet_forward.1} parent=0 // pred_region
    %v785 = vld [vmem:[#allocation2] sm:$0xff]
    %v786 = vld [vmem:[#allocation2 + $0x8] sm:$0xff]
    %v787 = vld [vmem:[#allocation2 + $0x10] sm:$0xff]
    %v788 = vadd.f32 %v785, %v761
    %v789 = vadd.f32 %v786, %v764
    %v790 = vadd.f32 %v787, %v769
    %791 = vst [vmem:[#allocation2] sm:$0xff] %v788
    %792 = vst [vmem:[#allocation2 + $0x8] sm:$0xff] %v789
    %793 = vst [vmem:[#allocation2 + $0x10] sm:$0xff] %v790
  $region37: #{_triplet_forward.1} parent=0 // pred_fallthru
    _
  // Predicated region
  $region38: #{_triplet_forward.1} parent=0 // pred_check
    %p794 = pneg %p774
  $region39: #{_triplet_forward.1} parent=0 // pred_check_branch
    %796 = sbr.rel (%p794) target = $region41
  $region40: #{_triplet_forward.1} parent=0 // pred_region
    %v797 = vld [vmem:[%s4] sm:$0x1]
    %v798 = vld [vmem:[%s6] sm:$0x1]
    %v799 = vld [vmem:[#allocation2] sm:$0xff]
    %v800 = vld [vmem:[#allocation2 + $0x8] sm:$0xff]
    %v801 = vld [vmem:[#allocation2 + $0x10] sm:$0xff]
    %v803 = vlaneseq
    %v804 = vshrl.u32 %v803, 7
    %v805 = vsub.s32 0, %v804
    %v806 = vrot.slane %v797, %v805
    %v808 = vadd.f32 %v799, %v806
    %v809 = vadd.f32 %v800, %v806
    %v810 = vadd.f32 %v801, %v806
    %v811 = vmax.f32 %v808, 0.0
    %v812 = vmax.f32 %v809, 0.0
    %v813 = vmax.f32 %v810, 0.0
    %v814 = vpack.c.bf16 %v812, %v811
    %v815 = vpack.c.bf16 %v813, %v813
    %v816 = vld [vmem:[%s5] sm:$0xf]
    %v817 = vld [vmem:[%s5 + $0x4] sm:$0xf]
    %v818 = vld [vmem:[%s5 + $0x8] sm:$0xf]
    %v819 = vld [vmem:[%s5 + $0xc] sm:$0xf]
    %v820 = vld [vmem:[%s5 + $0x10] sm:$0xf]
    %v821 = vld [vmem:[%s5 + $0x14] sm:$0xf]
    %v822 = vld [vmem:[%s5 + $0x18] sm:$0xf]
    %v823 = vld [vmem:[%s5 + $0x1c] sm:$0xf]
    %v824 = vld [vmem:[%s5 + $0x20] sm:$0xf]
    %v825 = vld [vmem:[%s5 + $0x24] sm:$0xf]
    %v826 = vld [vmem:[%s5 + $0x28] sm:$0xf]
    %v827 = vld [vmem:[%s5 + $0x2c] sm:$0xf]
    %v828 = vld [vmem:[%s5 + $0x30] sm:$0xf]
    %v829 = vld [vmem:[%s5 + $0x34] sm:$0xf]
    %v830 = vld [vmem:[%s5 + $0x38] sm:$0xf]
    %v831 = vld [vmem:[%s5 + $0x3c] sm:$0xf]
    %v833 = vlaneseq
    %v834 = vshrl.u32 %v833, 7
    %v835 = vsub.s32 0, %v834
    %v836 = vrot.slane %v798, %v835
    %v854 = vunpack.c.l.b16 %v816
    %v855 = vunpack.c.l.b16 %v817
    %v856 = vunpack.c.l.b16 %v818
    %v857 = vunpack.c.l.b16 %v819
    %v858 = vunpack.c.l.b16 %v820
    %v859 = vunpack.c.l.b16 %v821
    %v860 = vunpack.c.l.b16 %v822
    %v861 = vunpack.c.l.b16 %v823
    %v862 = vunpack.c.l.b16 %v824
    %v863 = vunpack.c.l.b16 %v825
    %v864 = vunpack.c.l.b16 %v826
    %v865 = vunpack.c.l.b16 %v827
    %v866 = vunpack.c.l.b16 %v828
    %v867 = vunpack.c.l.b16 %v829
    %v868 = vunpack.c.l.b16 %v830
    %v869 = vunpack.c.l.b16 %v831
    %v870 = vpack.c.b16 %v855, %v854
    %v871 = vpack.c.b16 %v857, %v856
    %v872 = vpack.c.b16 %v859, %v858
    %v873 = vpack.c.b16 %v861, %v860
    %v874 = vpack.c.b16 %v863, %v862
    %v875 = vpack.c.b16 %v865, %v864
    %v876 = vpack.c.b16 %v867, %v866
    %v877 = vpack.c.b16 %v869, %v868
    %886 = vmatprep.subr.bf16.mxu0 0
    %887 = vmatpush1.bf16.msra.mxu0 %v877
    %888 = vmatprep.subr.bf16.mxu0 0
    %889 = vmatpush1.bf16.msra.mxu0 %v876
    %890 = vmatprep.subr.bf16.mxu0 0
    %891 = vmatpush1.bf16.msra.mxu0 %v875
    %892 = vmatprep.subr.bf16.mxu0 0
    %893 = vmatpush1.bf16.msra.mxu0 %v874
    %894 = vmatprep.subr.bf16.mxu0 0
    %895 = vmatpush1.bf16.msra.mxu0 %v873
    %896 = vmatprep.subr.bf16.mxu0 0
    %897 = vmatpush1.bf16.msra.mxu0 %v872
    %898 = vmatprep.subr.bf16.mxu0 0
    %899 = vmatpush1.bf16.msra.mxu0 %v871
    %900 = vmatprep.subr.bf16.mxu0 0
    %901 = vmatpush1.bf16.msra.mxu0 %v870
    %902 = vmatprep.subr.bf16.mxu0 0
    %903 = vmatpush2.bf16.msra.mxu0 0
    %904 = vmatprep.subr.bf16.mxu0 0
    %905 = vmatpush2.bf16.msra.mxu0 0
    %906 = vmatprep.subr.bf16.mxu0 0
    %907 = vmatpush2.bf16.msra.mxu0 0
    %908 = vmatprep.subr.bf16.mxu0 0
    %909 = vmatpush2.bf16.msra.mxu0 0
    %910 = vmatprep.subr.bf16.mxu0 0
    %911 = vmatpush2.bf16.msra.mxu0 0
    %912 = vmatprep.subr.bf16.mxu0 0
    %913 = vmatpush2.bf16.msra.mxu0 0
    %914 = vmatprep.subr.bf16.mxu0 0
    %915 = vmatpush2.bf16.msra.mxu0 0
    %916 = vmatprep.subr.bf16.mxu0 0
    %917 = vmatpush2.bf16.msra.mxu0 0
    %918 = vmatprep.mubr.bf16.mxu0 0
    %919 = vmatmul.mubr.bf16.gmra.mxu0 %v814
    %v920 = vpop.f32.mrf.mxu0
    %v921 = vadd.f32 %v836, %v920
    %v922 = vpop.f32.mrf.mxu0
    %v923 = vpop.f32.mrf.mxu0
    %v924 = vadd.f32 %v836, %v923
    %v925 = vpop.f32.mrf.mxu0
    %926 = vmatprep.mubr.bf16.mxu0 0
    %927 = vmatmul.mubr.bf16.gmra.mxu0 %v815
    %v928 = vpop.f32.mrf.mxu0
    %v929 = vadd.f32 %v836, %v928
    %v930 = vpop.f32.mrf.mxu0
    %v931 = vpop.f32.mrf.mxu0
    %v932 = vpop.f32.mrf.mxu0
    %933 = vdwg.mxu0
    %934 = vst [vmem:[%s7] sm:$0xff] %v921
    %935 = vst [vmem:[%s8] sm:$0xff] %v924
    %936 = vst [vmem:[%s9] sm:$0xff] %v929
  $region41: #{_triplet_forward.1} parent=0 // pred_fallthru
    _
  // Predicated region
  $region42: #{_triplet_forward.1} parent=0 // pred_check
    _
  $region43: #{_triplet_forward.1} parent=0 // pred_check_branch
    %938 = sbr.rel (0) target = $region45
  $region44: #{_triplet_forward.1} parent=0 // pred_region
    _
  $region45: #{_triplet_forward.1} parent=0 // pred_fallthru
    _
  // Predicated region
  $region46: #{_triplet_forward.1} parent=0 // pred_check
    _
  $region47: #{_triplet_forward.1} parent=0 // pred_check_branch
    %940 = sbr.rel (0) target = $region49
  $region48: #{_triplet_forward.1} parent=0 // pred_region
    _
  $region49: #{_triplet_forward.1} parent=0 // pred_fallthru
    _
  // Predicated region
  $region50: #{_triplet_forward.1} parent=0 // pred_check
    _
  $region51: #{_triplet_forward.1} parent=0 // pred_check_branch
    %942 = sbr.rel (0) target = $region53
  $region52: #{_triplet_forward.1} parent=0 // pred_region
    _
  $region53: #{_triplet_forward.1} parent=0 // pred_fallthru
    _
  // Predicated region
  $region54: #{_triplet_forward.1} parent=0 // pred_check
    _
  $region55: #{_triplet_forward.1} parent=0 // pred_check_branch
    %944 = sbr.rel (0) target = $region57
  $region56: #{_triplet_forward.1} parent=0 // pred_region
    _
  $region57: #{_triplet_forward.1} parent=0 // pred_fallthru
    _
  // Predicated region
  $region58: #{_triplet_forward.1} parent=0 // pred_check
    _
  $region59: #{_triplet_forward.1} parent=0 // pred_check_branch
    %946 = sbr.rel (0) target = $region61
  $region60: #{_triplet_forward.1} parent=0 // pred_region
    _
  $region61: #{_triplet_forward.1} parent=0 // pred_fallthru
    _
  // Predicated region
  $region62: #{_triplet_forward.1} parent=0 // pred_check
    _
  $region63: #{_triplet_forward.1} parent=0 // pred_check_branch
    %948 = sbr.rel (0) target = $region65
  $region64: #{_triplet_forward.1} parent=0 // pred_region
    _
  $region65: #{_triplet_forward.1} parent=0 // pred_fallthru
    _

</llo_original>
